<compile_context>
chip_gen: v7x
topology: tpu7x:2x2x1
jax: 0.10.0
libtpu: 0.0.40
codegen_flags: <defaults>
</compile_context>

<pallas_src>
import functools

import jax
import jax.numpy as jnp
from jax.experimental import pallas as pl
from jax.experimental.pallas import tpu as pltpu

_SUBLANE = 8          # second-last-dim alignment target
_MAX_TILE_B = 4096    # batch-tile cap (x+out per buffer ~ 4096*(16+24)*4B = 640 KiB)


def _round_up(x: int, m: int) -> int:
    return ((x + m - 1) // m) * m


def _traj_linear_kernel(x_ref, w_ref, b_ref, o_ref):
    # x_ref: [TILE_B, F_in], w_ref: [F_in, F_out],
    # b_ref: [1, F_out],     o_ref: [TILE_B, F_out]
    acc = jnp.dot(x_ref[...], w_ref[...], preferred_element_type=jnp.float32)
    o_ref[...] = (acc + b_ref[...]).astype(o_ref.dtype)


@functools.partial(jax.jit, static_argnames=("t_pred",))
def traj_predict(obs_traj: jax.Array, weight: jax.Array, bias: jax.Array,
                 *, t_pred: int) -> jax.Array:
    """obs_traj: [B, T_obs, D] -> predicted traj [B, T_pred, D]."""
    B, T_obs, D = obs_traj.shape
    f_in = T_obs * D
    f_out = t_pred * D
    assert weight.shape == (f_in, f_out)
    assert bias.shape == (f_out,)

    # ---- batch tiling ------------------------------------------------------
    # Pad the batch only to the sublane granule, then pick tile_b so that
    # (a) there are >= 2 grid steps when possible (v7x megacore sharding),
    # (b) over-padding is bounded (<= one sublane group for 2-tile batches),
    # (c) tile_b is large enough to amortize the per-grid-step overhead.
    b_pad8 = _round_up(B, _SUBLANE)
    if b_pad8 > _SUBLANE:
        tile_b = min(_MAX_TILE_B, _round_up(pl.cdiv(b_pad8, 2), _SUBLANE))
    else:
        tile_b = _SUBLANE
    grid_b = pl.cdiv(b_pad8, tile_b)
    b_pad = grid_b * tile_b

    # ---- operands (no feature-dim padding; only minimal batch-row padding) --
    x2d = obs_traj.reshape(B, f_in).astype(jnp.float32)
    if b_pad != B:
        x2d = jnp.pad(x2d, ((0, b_pad - B), (0, 0)))
    w = weight.astype(jnp.float32)
    b2d = bias.astype(jnp.float32).reshape(1, f_out)

    out2d = pl.pallas_call(
        _traj_linear_kernel,
        out_shape=jax.ShapeDtypeStruct((b_pad, f_out), jnp.float32),
        grid_spec=pltpu.PrefetchScalarGridSpec(
            num_scalar_prefetch=0,
            grid=(grid_b,),
            in_specs=[
                # x: tiled over the batch axis; last dim == full array dim
                # (legal block, no lane padding), double-buffered DMA.
                pl.BlockSpec((tile_b, f_in), lambda i: (i, 0)),
                # weight / bias: constant index_map -> VMEM-resident.
                pl.BlockSpec((f_in, f_out), lambda i: (0, 0)),
                pl.BlockSpec((1, f_out), lambda i: (0, 0)),
            ],
            out_specs=pl.BlockSpec((tile_b, f_out), lambda i: (i, 0)),
        ),
        compiler_params=pltpu.CompilerParams(
            dimension_semantics=("parallel",)),
    )(x2d, w, b2d)

    # Drop padded batch rows only (rows are independent; padded rows are
    # never observed).  No feature-dim slice is needed anymore.
    if b_pad != B:
        out2d = out2d[:B]
    return out2d.reshape(B, t_pred, D)


if __name__ == "__main__":
    # Small deterministic shapes consistent with the trajectory contract.
    # B=20 exercises the two-grid-step path and the batch-row padding path.
    B, T_OBS, T_PRED, D = 20, 8, 12, 2

    key = jax.random.PRNGKey(0)
    k_x, k_w, k_b = jax.random.split(key, 3)

    obs_traj = jax.random.normal(k_x, (B, T_OBS, D), dtype=jnp.float32)

    f_in, f_out = T_OBS * D, T_PRED * D
    weight = jax.random.normal(k_w, (f_in, f_out), dtype=jnp.float32) * 0.1
    bias = jax.random.normal(k_b, (f_out,), dtype=jnp.float32) * 0.01

    pred = traj_predict(obs_traj, weight, bias, t_pred=T_PRED)
    pred = jax.block_until_ready(pred)

    # Reference check in plain JAX.
    ref = (obs_traj.reshape(B, f_in) @ weight + bias).reshape(B, T_PRED, D)
    assert pred.shape == (B, T_PRED, D)
    assert jnp.allclose(pred, ref, atol=1e-5, rtol=1e-5)

    print("KERNEL_OK")
</pallas_src>

<mosaic_0001>
module attributes {stable_mosaic.version = 11 : i64} {
  func.func @_traj_linear_kernel(%arg0: i32, %arg1: memref<16x16xf32, #tpu.memory_space<vmem>>, %arg2: memref<16x24xf32, #tpu.memory_space<vmem>>, %arg3: memref<1x24xf32, #tpu.memory_space<vmem>>, %arg4: memref<16x24xf32, #tpu.memory_space<vmem>>) attributes {dimension_semantics = [#tpu.dimension_semantics<parallel>], iteration_bounds = array<i64: 2>, scalar_prefetch = 0 : i64, scratch_operands = 0 : i64, tpu.core_type = #tpu.core_type<tc>, window_params = [{transform_indices = @transform_0, window_bounds = array<i64: 16, 16>}, {pipeline_mode = #tpu.pipeline_mode<synchronous>, transform_indices = @transform_1, window_bounds = array<i64: 16, 24>}, {pipeline_mode = #tpu.pipeline_mode<synchronous>, transform_indices = @transform_2, window_bounds = array<i64: 1, 24>}, {transform_indices = @transform_3, window_bounds = array<i64: 16, 24>}]} {
    %c0 = arith.constant 0 : index
    %c0_0 = arith.constant 0 : index
    %0 = vector.load %arg1[%c0, %c0_0] : memref<16x16xf32, #tpu.memory_space<vmem>>, vector<16x16xf32>
    %c0_1 = arith.constant 0 : index
    %c0_2 = arith.constant 0 : index
    %1 = vector.load %arg2[%c0_1, %c0_2] : memref<16x24xf32, #tpu.memory_space<vmem>>, vector<16x24xf32>
    %cst = arith.constant dense<0.000000e+00> : vector<16x24xf32>
    %2 = tpu.matmul %0, %1, %cst {dimension_numbers = #tpu.dot_dimension_numbers<[1], [0], [0], [1], [0, 0, 1, 1], [], []>} : vector<16x16xf32>, vector<16x24xf32>, vector<16x24xf32> -> vector<16x24xf32>
    %c0_3 = arith.constant 0 : index
    %c0_4 = arith.constant 0 : index
    %3 = vector.load %arg3[%c0_3, %c0_4] : memref<1x24xf32, #tpu.memory_space<vmem>>, vector<1x24xf32>
    %4 = vector.broadcast %3 : vector<1x24xf32> to vector<16x24xf32>
    %5 = arith.addf %2, %4 : vector<16x24xf32>
    %c0_5 = arith.constant 0 : index
    %c0_6 = arith.constant 0 : index
    %6 = vector.load %arg4[%c0_5, %c0_6] : memref<16x24xf32, #tpu.memory_space<vmem>>, vector<16x24xf32>
    tpu.vector_store %arg4[%c0_5, %c0_6], %5 {strides = array<i32>} : memref<16x24xf32, #tpu.memory_space<vmem>>, vector<16x24xf32>,
    return
  }
  func.func @transform_0(%arg0: i32) -> (i32, i32) {
    %c0_i32 = arith.constant 0 : i32
    %c0_i32_0 = arith.constant 0 : i32
    return %arg0, %c0_i32 : i32, i32
  }
  func.func @transform_1(%arg0: i32) -> (i32, i32) {
    %c0_i32 = arith.constant 0 : i32
    %c0_i32_0 = arith.constant 0 : i32
    %c0_i32_1 = arith.constant 0 : i32
    return %c0_i32, %c0_i32_0 : i32, i32
  }
  func.func @transform_2(%arg0: i32) -> (i32, i32) {
    %c0_i32 = arith.constant 0 : i32
    %c0_i32_0 = arith.constant 0 : i32
    %c0_i32_1 = arith.constant 0 : i32
    return %c0_i32, %c0_i32_0 : i32, i32
  }
  func.func @transform_3(%arg0: i32) -> (i32, i32) {
    %c0_i32 = arith.constant 0 : i32
    %c0_i32_0 = arith.constant 0 : i32
    return %arg0, %c0_i32 : i32, i32
  }
}

</mosaic_0001>

<llo_original>
// kernel: traj_predict.1
$region0: #{traj_predict.1}
  #allocation0 [shape = 'u32[]', space=smem, size = 0x4, offset = 0x4, fixed_abs, tag = 'smem constant byte address 0x4 - core index']
  #allocation1 [shape = 'u32[144,128]{1,0:T(1,128)}', space=vmem, size = 0x12000, scoped, tag = 'internal scratch']
  %s0 = inlined_call_operand.vmem [shape: f32[32,16], index: 0, kind: input, shape index: {}]
  %s1 = inlined_call_operand.vmem [shape: f32[16,24], index: 1, kind: input, shape index: {}]
  %s2 = inlined_call_operand.vmem [shape: f32[1,24], index: 2, kind: input, shape index: {}]
  %s3 = inlined_call_operand.vmem [shape: f32[32,24], index: 3, kind: output, shape index: {}]
  %s4 = sld [smem:[#allocation0]]
  $region45: #{traj_predict.1} parent=0
    _
  %s6 = ssub.s32 1, %s4
  %s7 = scalar_select 0, %s6, %s4
  loop: start=0, step=1, limit=4
  $region2: #{traj_predict.1} parent=0 // loop_pre_header
    _
  $region3: #{traj_predict.1} parent=0 // loop_header
    %s9 = sphi 0, %s13
    %p10 = scmp.ge.s32.totalorder %s9, 4
    %s19 = sphi 0, %s21
    %s22 = sphi 0, %s19
    %s23 = sphi 0, %s22
    %s39 = sphi 0, %s23
    %s43 = sphi 0, %s43
    %s45 = sphi 0, %s43
    %s46 = sphi 0, %s45
    %s60 = sphi 0, %s46
    %s64 = sphi 0, %s64
    %s66 = sphi 0, %s64
    %s67 = sphi 0, %s66
    %s81 = sphi 0, %s67
    %s87 = sphi 0, %s89
    %s90 = sphi 0, %s87
    %s91 = sphi 0, %s90
    %s107 = sphi 0, %s91
  $region4: #{traj_predict.1} parent=0 // loop_header_branch
    %12 = sbr.rel (%p10) target = $region8
  $region5: #{traj_predict.1} parent=0 // loop_body
    %s14 = ssub.s32 %s9, 1
    %s15 = ssub.s32 %s9, 2
    %s16 = sadd.s32 %s9, 1
    %s17 = ssub.s32 %s9, %s16
    %p18 = scmp.eq.s32.totalorder %s17, 0
    %s20 = sadd.s32 %s19, 1
    %s21 = scalar_select %p18, %s19, %s20
    %p24 = pneg %p18
    %p25 = scmp.eq.s32.totalorder %s9, 1
    %p26 = por %p24, %p25
    %p27 = scmp.ne.s32.totalorder %s19, %s22
    %p28 = scmp.eq.s32.totalorder %s9, 0
    %p29 = por %p27, %p28
    %p30 = scmp.ne.s32.totalorder %s19, %s22
    %p31 = scmp.eq.s32.totalorder %s14, 1
    %p32 = por %p30, %p31
    %p33 = scmp.ne.s32.totalorder %s22, %s23
    %p34 = scmp.eq.s32.totalorder %s14, 0
    %p35 = por %p33, %p34
    %p36 = scmp.ne.s32.totalorder %s22, %s23
    %p37 = scmp.eq.s32.totalorder %s15, 1
    %p38 = por %p36, %p37
    %p40 = scmp.ne.s32.totalorder %s23, %s39
    %p41 = scmp.eq.s32.totalorder %s15, 0
    %p42 = por %p40, %p41
    %s44 = sadd.s32 %s43, 1
    %p47 = scmp.eq.s32.totalorder %s9, 1
    %p48 = scmp.ne.s32.totalorder %s43, %s45
    %p49 = scmp.eq.s32.totalorder %s9, 0
    %p50 = por %p48, %p49
    %p51 = scmp.ne.s32.totalorder %s43, %s45
    %p52 = scmp.eq.s32.totalorder %s14, 1
    %p53 = por %p51, %p52
    %p54 = scmp.ne.s32.totalorder %s45, %s46
    %p55 = scmp.eq.s32.totalorder %s14, 0
    %p56 = por %p54, %p55
    %p57 = scmp.ne.s32.totalorder %s45, %s46
    %p58 = scmp.eq.s32.totalorder %s15, 1
    %p59 = por %p57, %p58
    %p61 = scmp.ne.s32.totalorder %s46, %s60
    %p62 = scmp.eq.s32.totalorder %s15, 0
    %p63 = por %p61, %p62
    %s65 = sadd.s32 %s64, 1
    %p68 = scmp.eq.s32.totalorder %s9, 1
    %p69 = scmp.ne.s32.totalorder %s64, %s66
    %p70 = scmp.eq.s32.totalorder %s9, 0
    %p71 = por %p69, %p70
    %p72 = scmp.ne.s32.totalorder %s64, %s66
    %p73 = scmp.eq.s32.totalorder %s14, 1
    %p74 = por %p72, %p73
    %p75 = scmp.ne.s32.totalorder %s66, %s67
    %p76 = scmp.eq.s32.totalorder %s14, 0
    %p77 = por %p75, %p76
    %p78 = scmp.ne.s32.totalorder %s66, %s67
    %p79 = scmp.eq.s32.totalorder %s15, 1
    %p80 = por %p78, %p79
    %p82 = scmp.ne.s32.totalorder %s67, %s81
    %p83 = scmp.eq.s32.totalorder %s15, 0
    %p84 = por %p82, %p83
    %s85 = ssub.s32 %s9, %s16
    %p86 = scmp.eq.s32.totalorder %s85, 0
    %s88 = sadd.s32 %s87, 1
    %s89 = scalar_select %p86, %s87, %s88
    %p92 = pneg %p86
    %p93 = scmp.eq.s32.totalorder %s9, 1
    %p94 = por %p92, %p93
    %p95 = scmp.ne.s32.totalorder %s87, %s90
    %p96 = scmp.eq.s32.totalorder %s9, 0
    %p97 = por %p95, %p96
    %p98 = scmp.ne.s32.totalorder %s87, %s90
    %p99 = scmp.eq.s32.totalorder %s14, 1
    %p100 = por %p98, %p99
    %p101 = scmp.ne.s32.totalorder %s90, %s91
    %p102 = scmp.eq.s32.totalorder %s14, 0
    %p103 = por %p101, %p102
    %p104 = scmp.ne.s32.totalorder %s90, %s91
    %p105 = scmp.eq.s32.totalorder %s15, 1
    %p106 = por %p104, %p105
    %p108 = scmp.ne.s32.totalorder %s91, %s107
    %p109 = scmp.eq.s32.totalorder %s15, 0
    %p110 = por %p108, %p109
    %p111 = scmp.le.s32.totalorder 1, %s9
    %p112 = scmp.lt.s32.totalorder %s9, 3
    %p113 = pnand %p111, %p112
    %p114 = pneg %p113
    // Predicated region
    $region9: #{traj_predict.1} parent=5 // pred_check
      _
    $region10: #{traj_predict.1} parent=5 // pred_check_branch
      %116 = sbr.rel (%p113) target = $region12
    $region11: #{traj_predict.1} parent=5 // pred_region
      %s117 = ssub.s32 %s9, 1
      // Predicated region
      $region13: #{traj_predict.1} parent=11 // pred_check
        %p118 = pneg %p56
      $region14: #{traj_predict.1} parent=11 // pred_check_branch
        %120 = sbr.rel (%p118) target = $region16
      $region15: #{traj_predict.1} parent=11 // pred_region
        _
      $region16: #{traj_predict.1} parent=11 // pred_fallthru
        _
      // Predicated region
      $region17: #{traj_predict.1} parent=11 // pred_check
        %p121 = pneg %p77
      $region18: #{traj_predict.1} parent=11 // pred_check_branch
        %123 = sbr.rel (%p121) target = $region20
      $region19: #{traj_predict.1} parent=11 // pred_region
        _
      $region20: #{traj_predict.1} parent=11 // pred_fallthru
        _
    $region12: #{traj_predict.1} parent=5 // pred_fallthru
      _
    %p124 = scmp.lt.s32.totalorder %s9, 2
    // Predicated region
    $region21: #{traj_predict.1} parent=5 // pred_check
      %p125 = pneg %p124
    $region22: #{traj_predict.1} parent=5 // pred_check_branch
      %127 = sbr.rel (%p125) target = $region24
    $region23: #{traj_predict.1} parent=5 // pred_region
      // Predicated region
      $region25: #{traj_predict.1} parent=23 // pred_check
        %p128 = pneg %p29
      $region26: #{traj_predict.1} parent=23 // pred_check_branch
        %130 = sbr.rel (%p128) target = $region28
      $region27: #{traj_predict.1} parent=23 // pred_region
        %s131 = smul.u32 2, %s9
        %p132 = scmp.lt.s32.totalorder %s131, 3
        %s133 = scalar_select %p132, %s131, 3
        %s134 = smul.addr %s133, 8
        %s135 = scalar_lea.vmem %s0, %s134
        %s136 = smul.u32 2, %s9
      $region28: #{traj_predict.1} parent=23 // pred_fallthru
        _
    $region24: #{traj_predict.1} parent=5 // pred_fallthru
      _
    %p137 = scmp.le.s32.totalorder 1, %s9
    %p138 = scmp.lt.s32.totalorder %s9, 3
    %p139 = pnand %p137, %p138
    %p140 = pneg %p139
    // Predicated region
    $region29: #{traj_predict.1} parent=5 // pred_check
      _
    $region30: #{traj_predict.1} parent=5 // pred_check_branch
      %142 = sbr.rel (%p139) target = $region32
    $region31: #{traj_predict.1} parent=5 // pred_region
      %s143 = ssub.s32 %s9, 1
      %s144 = smul.u32 2, %s14
      %p145 = scmp.lt.s32.totalorder %s144, 3
      %s146 = scalar_select %p145, %s144, 3
      %s147 = smul.addr %s146, 8
      %s148 = scalar_lea.vmem %s0, %s147
      %p149 = pneg %p35
      %p150 = pneg %p32
      %p151 = pneg %p56
      %p152 = pneg %p53
      %p153 = pneg %p77
      %p154 = pneg %p74
      %p155 = pneg %p103
      %p156 = pneg %p100
      %s157 = smul.u32 2, %s14
      %p158 = scmp.lt.s32.totalorder %s157, 3
      %s159 = scalar_select %p158, %s157, 3
      %s160 = smul.addr %s159, 8
      %s161 = scalar_lea.vmem %s3, %s160
      %s162 = smul.u32 2, %s14
      %p163 = scmp.lt.s32.totalorder %s162, 3
      %s164 = scalar_select %p163, %s162, 3
      %s165 = smul.addr %s164, 8
      %s166 = scalar_lea.vmem %s0, %s165
      %s167 = smul.u32 2, %s14
      %s168 = smul.u32 2, %s14
      %p169 = scmp.lt.s32.totalorder %s168, 3
      %s170 = scalar_select %p169, %s168, 3
      %s171 = smul.addr %s170, 8
      %s172 = scalar_lea.vmem %s3, %s171
      %s173 = smul.u32 2, %s14
      %v174 = vld [vmem:[%s166] sm:$0xff]
      %v175 = vld [vmem:[%s166 + $0x8] sm:$0xff]
      %v176 = vld [vmem:[%s1] sm:$0xff]
      %v177 = vld [vmem:[%s1 + $0x8] sm:$0xff]
      %v178 = vld [vmem:[%s2] sm:$0x1]
      %v180 = vlaneseq
      %v181 = vshrl.u32 %v180, 7
      %v182 = vsub.s32 0, %v181
      %v183 = vrot.slane %v178, %v182
      %vm185 = vcmask 130048
      %v187 = vsel %vm185, %v174, 0
      %v190 = vsel %vm185, %v175, 0
      %192 = vmatprep.subr.mxu0 0.0
      %193 = vmatpush1.msra.mxu0 %v176
      %194 = vmatprep.subr.mxu0 0.0
      %195 = vmatpush1.msra.mxu0 %v177
      %196 = vmatprep.subr.mxu0 0.0
      %197 = vmatpush1.msra.mxu0 0.0
      %198 = vmatprep.subr.mxu0 0.0
      %199 = vmatpush1.msra.mxu0 0.0
      %200 = vmatprep.subr.mxu0 0.0
      %201 = vmatpush1.msra.mxu0 0.0
      %202 = vmatprep.subr.mxu0 0.0
      %203 = vmatpush1.msra.mxu0 0.0
      %204 = vmatprep.subr.mxu0 0.0
      %205 = vmatpush1.msra.mxu0 0.0
      %206 = vmatprep.subr.mxu0 0.0
      %207 = vmatpush1.msra.mxu0 0.0
      %208 = vmatprep.subr.mxu0 0.0
      %209 = vmatpush1.msra.mxu0 0.0
      %210 = vmatprep.subr.mxu0 0.0
      %211 = vmatpush1.msra.mxu0 0.0
      %212 = vmatprep.subr.mxu0 0.0
      %213 = vmatpush1.msra.mxu0 0.0
      %214 = vmatprep.subr.mxu0 0.0
      %215 = vmatpush1.msra.mxu0 0.0
      %216 = vmatprep.subr.mxu0 0.0
      %217 = vmatpush1.msra.mxu0 0.0
      %218 = vmatprep.subr.mxu0 0.0
      %219 = vmatpush1.msra.mxu0 0.0
      %220 = vmatprep.subr.mxu0 0.0
      %221 = vmatpush1.msra.mxu0 0.0
      %222 = vmatprep.subr.mxu0 0.0
      %223 = vmatpush1.msra.mxu0 0.0
      %224 = vmatprep.subr.mxu0 0.0
      %225 = vmatpush1.msra.mxu0 0.0
      %226 = vmatprep.subr.mxu0 0.0
      %227 = vmatpush1.msra.mxu0 0.0
      %228 = vmatprep.subr.mxu0 0.0
      %229 = vmatpush1.msra.mxu0 0.0
      %230 = vmatprep.subr.mxu0 0.0
      %231 = vmatpush1.msra.mxu0 0.0
      %232 = vmatprep.subr.mxu0 0.0
      %233 = vmatpush1.msra.mxu0 0.0
      %234 = vmatprep.subr.mxu0 0.0
      %235 = vmatpush1.msra.mxu0 0.0
      %236 = vmatprep.subr.mxu0 0.0
      %237 = vmatpush1.msra.mxu0 0.0
      %238 = vmatprep.subr.mxu0 0.0
      %239 = vmatpush1.msra.mxu0 0.0
      %240 = vmatprep.subr.mxu0 0.0
      %241 = vmatpush1.msra.mxu0 0.0
      %242 = vmatprep.subr.mxu0 0.0
      %243 = vmatpush1.msra.mxu0 0.0
      %244 = vmatprep.subr.mxu0 0.0
      %245 = vmatpush1.msra.mxu0 0.0
      %246 = vmatprep.subr.mxu0 0.0
      %247 = vmatpush1.msra.mxu0 0.0
      %248 = vmatprep.subr.mxu0 0.0
      %249 = vmatpush1.msra.mxu0 0.0
      %250 = vmatprep.subr.mxu0 0.0
      %251 = vmatpush1.msra.mxu0 0.0
      %252 = vmatprep.subr.mxu0 0.0
      %253 = vmatpush1.msra.mxu0 0.0
      %254 = vmatprep.subr.mxu0 0.0
      %255 = vmatpush1.msra.mxu0 0.0
      %256 = vmatprep.mubr.f32.mxu0 0.0
      %257 = vmatmul.mubr.f32.gmra.mrb[0].mxu0 %v187
      %v258 = vpop.f32.mrb[0].mxu0
      %v259 = vadd.f32 %v183, %v258
      %v260 = vpop.f32.mrb[0].mxu0
      %261 = vmatprep.mubr.f32.mxu0 0.0
      %262 = vmatmul.mubr.f32.gmra.mrb[0].mxu0 %v190
      %v263 = vpop.f32.mrb[0].mxu0
      %v264 = vadd.f32 %v183, %v263
      %v265 = vpop.f32.mrb[0].mxu0
      %266 = vdwg.mxu0
      %vm267 = vcmask 195584
      %268 = vst.msk [vmem:[%s172] sm:$0xff] %vm267, %v259
      %269 = vst.msk [vmem:[%s172 + $0x8] sm:$0xff] %vm267, %v264
      %s270 = smul.u32 2, %s14
      %p271 = scmp.lt.s32.totalorder %s270, 3
      %s272 = scalar_select %p271, %s270, 3
      %s273 = smul.addr %s272, 8
      %s274 = scalar_lea.vmem %s3, %s273
      // Predicated region
      $region33: #{traj_predict.1} parent=31 // pred_check
        %p275 = pneg %p100
      $region34: #{traj_predict.1} parent=31 // pred_check_branch
        %277 = sbr.rel (%p275) target = $region36
      $region35: #{traj_predict.1} parent=31 // pred_region
        %s278 = smul.u32 2, %s14
      $region36: #{traj_predict.1} parent=31 // pred_fallthru
        _
    $region32: #{traj_predict.1} parent=5 // pred_fallthru
      _
    %p279 = scmp.le.s32.totalorder 2, %s9
    // Predicated region
    $region37: #{traj_predict.1} parent=5 // pred_check
      %p280 = pneg %p279
    $region38: #{traj_predict.1} parent=5 // pred_check_branch
      %282 = sbr.rel (%p280) target = $region40
    $region39: #{traj_predict.1} parent=5 // pred_region
      %s283 = ssub.s32 %s9, 2
      // Predicated region
      $region41: #{traj_predict.1} parent=39 // pred_check
        %p284 = pneg %p106
      $region42: #{traj_predict.1} parent=39 // pred_check_branch
        %286 = sbr.rel (%p284) target = $region44
      $region43: #{traj_predict.1} parent=39 // pred_region
        %s287 = smul.u32 2, %s15
        %p288 = scmp.lt.s32.totalorder %s287, 3
        %s289 = scalar_select %p288, %s287, 3
        %s290 = smul.addr %s289, 8
        %s291 = scalar_lea.vmem %s3, %s290
      $region44: #{traj_predict.1} parent=39 // pred_fallthru
        _
    $region40: #{traj_predict.1} parent=5 // pred_fallthru
      _
  $region6: #{traj_predict.1} parent=0 // loop_footer
    %s13 = sadd.s32 1, %s9
  $region7: #{traj_predict.1} parent=0 // loop_footer_branch
    %8 = sbr.rel target = $region3
  $region8: #{traj_predict.1} parent=0 // loop_exit
    _

</llo_original>
